<compile_context>
chip_gen: v7x
topology: tpu7x:2x2x1
jax: 0.10.0
libtpu: 0.0.40
codegen_flags: <defaults>
</compile_context>

<pallas_src>
import functools

import jax
import jax.numpy as jnp
from jax import lax
from jax.experimental import pallas as pl
from jax.experimental.pallas import tpu as pltpu

_LANE = 128


def _conv_stats_kernel(x_ref, w_ref, stats_ref):
    """Pass 1: per-channel sum / sum-of-squares of the (bias-free) conv output.

    x_ref     : (NB, L, K*C_in)   im2col'd input tile
    w_ref     : (K*C_in, C_pad)   folded conv weight
    stats_ref : (2, C_pad) f32    resident accumulator; row 0 = sum, row 1 = sum of squares
    """
    @pl.when(pl.program_id(0) == 0)
    def _init():
        stats_ref[...] = jnp.zeros_like(stats_ref)

    acc = lax.dot_general(
        x_ref[...], w_ref[...],
        dimension_numbers=(((2,), (0,)), ((), ())),
        preferred_element_type=jnp.float32)              # (NB, L, C_pad) f32
    acc2 = acc.reshape(-1, acc.shape[-1])
    s = jnp.sum(acc2, axis=0, keepdims=True)
    sq = jnp.sum(acc2 * acc2, axis=0, keepdims=True)
    stats_ref[...] += jnp.concatenate([s, sq], axis=0)   # zero-padded batch rows contribute 0


def _conv_bn_relu_dropout_kernel(x_ref, w_ref, scale_ref, shift_ref, *rest,
                                 apply_dropout, keep_threshold, inv_keep_prob):
    """Pass 2: conv (single im2col matmul) + fused BN scale/shift + ReLU + dropout."""
    if apply_dropout:
        bits_ref, out_ref = rest
    else:
        (out_ref,) = rest

    acc = lax.dot_general(
        x_ref[...], w_ref[...],
        dimension_numbers=(((2,), (0,)), ((), ())),
        preferred_element_type=jnp.float32)              # (NB, L, C_pad) f32

    y = acc * scale_ref[...] + shift_ref[...]            # conv bias + BN affine, fully fused
    y = jnp.maximum(y, 0.0)                              # ReLU

    if apply_dropout:
        keep = bits_ref[...] >= jnp.uint32(keep_threshold)
        y = jnp.where(keep, y * inv_keep_prob, 0.0)      # inverted dropout, single select

    out_ref[...] = y.astype(out_ref.dtype)


def conv1d_bn_relu_dropout(x_ncl, weight, bias, gamma, beta, *,
                           kernel_size=5, drop_p=0.5, eps=1e-5, training=True,
                           rng_key=None, running_mean=None, running_var=None,
                           compute_dtype=jnp.bfloat16,
                           tile_bytes=4 * 1024 * 1024,
                           vmem_limit_bytes=48 * 1024 * 1024):
    """x_ncl: (N, C_in, L), weight: (C_out, C_in, K) — PyTorch conventions. Returns (N, C_out, L)."""
    N, Cin, L = x_ncl.shape
    Cout = weight.shape[0]
    K = kernel_size
    pad = K // 2
    KC = K * Cin
    Cpad = ((Cout + _LANE - 1) // _LANE) * _LANE

    # --- im2col: (N, L, K*C_in), built in one fused XLA pass over the (small) input ---
    x_nlc = jnp.transpose(x_ncl, (0, 2, 1))
    x_halo = jnp.pad(x_nlc, ((0, 0), (pad, pad), (0, 0)))
    x_col = jnp.concatenate([x_halo[:, k:k + L, :] for k in range(K)],
                            axis=-1).astype(compute_dtype)             # (N, L, KC)

    # --- folded conv weight: (K*C_in, C_pad); padded output channels are exact zeros ---
    w_col = jnp.transpose(weight, (2, 1, 0)).reshape(KC, Cout)
    w_col = jnp.pad(w_col, ((0, 0), (0, Cpad - Cout))).astype(compute_dtype)

    def pad_c(v, fill=0.0):
        v = jnp.asarray(v, jnp.float32).reshape(-1)
        return jnp.pad(v, (0, Cpad - v.shape[0]), constant_values=fill)

    gamma_p, beta_p, bias_p = pad_c(gamma), pad_c(beta), pad_c(bias)

    # --- batch tiling: biggest tile whose f32 output block stays under the VMEM budget ---
    out_row_bytes = L * Cpad * 4
    NB = max(1, min(N, tile_bytes // out_row_bytes))
    num_tiles = -(-N // NB)                                            # cdiv
    Np = num_tiles * NB
    if Np != N:
        x_col = jnp.pad(x_col, ((0, Np - N), (0, 0), (0, 0)))

    x_spec = pl.BlockSpec((NB, L, KC), lambda i: (i, 0, 0))
    w_spec = pl.BlockSpec((KC, Cpad), lambda i: (0, 0))
    vec_spec = pl.BlockSpec((1, Cpad), lambda i: (0, 0))
    out_spec = pl.BlockSpec((NB, L, Cpad), lambda i: (i, 0, 0))

    if training:
        # Pass 1: global per-channel batch statistics of the conv output (accumulator output).
        stats = pl.pallas_call(
            _conv_stats_kernel,
            out_shape=jax.ShapeDtypeStruct((2, Cpad), jnp.float32),
            grid=(num_tiles,),
            in_specs=[x_spec, w_spec],
            out_specs=pl.BlockSpec((2, Cpad), lambda i: (0, 0)),
            compiler_params=pltpu.CompilerParams(
                dimension_semantics=("arbitrary",),
                vmem_limit_bytes=vmem_limit_bytes),
        )(x_col, w_col)
        cnt = float(N * L)
        mean = stats[0] / cnt
        var = jnp.maximum(stats[1] / cnt - mean * mean, 0.0)           # biased var (BN training)
        scale = gamma_p * lax.rsqrt(var + eps)
        # Conv bias cancels exactly under training-mode mean subtraction -> folded away.
        shift = beta_p - mean * scale
    else:
        rmean = pad_c(running_mean) if running_mean is not None else jnp.zeros((Cpad,), jnp.float32)
        rvar = pad_c(running_var, 1.0) if running_var is not None else jnp.ones((Cpad,), jnp.float32)
        scale = gamma_p * lax.rsqrt(rvar + eps)
        shift = beta_p + (bias_p - rmean) * scale

    scale2 = scale.reshape(1, Cpad)
    shift2 = shift.reshape(1, Cpad)

    apply_dropout = bool(training) and drop_p > 0.0
    inputs = [x_col, w_col, scale2, shift2]
    in_specs = [x_spec, w_spec, vec_spec, vec_spec]
    keep_threshold = 0
    inv_keep_prob = 1.0
    if apply_dropout:
        if rng_key is None:
            rng_key = jax.random.PRNGKey(0)
        bits = jax.random.bits(rng_key, (Np, L, Cpad), dtype=jnp.uint32)
        inputs.append(bits)
        in_specs.append(pl.BlockSpec((NB, L, Cpad), lambda i: (i, 0, 0)))
        keep_threshold = min(int(round(drop_p * 2.0 ** 32)), 2 ** 32 - 1)
        inv_keep_prob = 1.0 / (1.0 - drop_p)

    kernel = functools.partial(
        _conv_bn_relu_dropout_kernel,
        apply_dropout=apply_dropout,
        keep_threshold=keep_threshold,
        inv_keep_prob=inv_keep_prob)

    out_nlc = pl.pallas_call(
        kernel,
        out_shape=jax.ShapeDtypeStruct((Np, L, Cpad), jnp.float32),
        grid=(num_tiles,),
        in_specs=in_specs,
        out_specs=out_spec,
        compiler_params=pltpu.CompilerParams(
            dimension_semantics=("parallel",),
            vmem_limit_bytes=vmem_limit_bytes),
    )(*inputs)

    # NLC -> NCL, drop channel/batch padding (single fused XLA copy; torch-layout interface).
    return jnp.transpose(out_nlc[:N, :, :Cout], (0, 2, 1))


def _reference_forward(x_ncl, weight, bias, gamma, beta, kernel_size, eps):
    """Pure-JAX reference: Conv1d(pad=K//2) -> BatchNorm1d(train, batch stats) -> ReLU."""
    K = kernel_size
    pad = K // 2
    L = x_ncl.shape[2]
    xp = jnp.pad(x_ncl, ((0, 0), (0, 0), (pad, pad)))
    cols = jnp.stack([xp[:, :, k:k + L] for k in range(K)], axis=-1)   # (N, C_in, L, K)
    y = jnp.einsum('nclk,ock->nol', cols, weight) + bias[None, :, None]
    mean = jnp.mean(y, axis=(0, 2), keepdims=True)
    var = jnp.mean((y - mean) ** 2, axis=(0, 2), keepdims=True)
    y = (y - mean) * lax.rsqrt(var + eps)
    y = y * gamma[None, :, None] + beta[None, :, None]
    return jnp.maximum(y, 0.0)


if __name__ == "__main__":
    # Small shapes consistent with the module: batch=2, input_dim=4, seq_len=16, hidden=32
    N, C_IN, L, HIDDEN, K = 2, 4, 16, 32, 5

    key = jax.random.PRNGKey(0)
    k_x, k_w, k_b, k_g, k_beta, k_drop = jax.random.split(key, 6)

    x = jax.random.normal(k_x, (N, C_IN, L), jnp.float32)                  # torch NCL
    weight = jax.random.normal(k_w, (HIDDEN, C_IN, K), jnp.float32) * 0.1  # (C_out, C_in, K)
    bias = jax.random.normal(k_b, (HIDDEN,), jnp.float32) * 0.1
    gamma = 1.0 + 0.1 * jax.random.normal(k_g, (HIDDEN,), jnp.float32)
    beta = 0.1 * jax.random.normal(k_beta, (HIDDEN,), jnp.float32)

    # Correctness check (dropout off, f32 compute) against a pure-JAX reference.
    out_check = conv1d_bn_relu_dropout(x, weight, bias, gamma, beta,
                                       kernel_size=K, drop_p=0.0, training=True,
                                       compute_dtype=jnp.float32)
    ref = _reference_forward(x, weight, bias, gamma, beta, K, 1e-5)
    assert out_check.shape == ref.shape
    assert bool(jnp.allclose(out_check, ref, atol=1e-2, rtol=1e-2)), \
        float(jnp.max(jnp.abs(out_check - ref)))

    # Full training-mode forward (bf16 storage / f32 accumulation, dropout p=0.5).
    out = conv1d_bn_relu_dropout(x, weight, bias, gamma, beta,
                                 kernel_size=K, drop_p=0.5, training=True,
                                 rng_key=k_drop)
    out = jax.block_until_ready(out)
    assert out.shape == (N, HIDDEN, L), out.shape
    print("KERNEL_OK")
</pallas_src>

<mosaic_0001>
module attributes {stable_mosaic.version = 11 : i64} {
  func.func @_conv_stats_kernel(%arg0: i32, %arg1: memref<2x16x20xf32, #tpu.memory_space<vmem>>, %arg2: memref<20x128xf32, #tpu.memory_space<vmem>>, %arg3: memref<2x128xf32, #tpu.memory_space<vmem>>) attributes {dimension_semantics = [#tpu.dimension_semantics<arbitrary>], iteration_bounds = array<i64: 1>, scalar_prefetch = 0 : i64, scratch_operands = 0 : i64, tpu.core_type = #tpu.core_type<tc>, window_params = [{transform_indices = @transform_0, window_bounds = array<i64: 2, 16, 20>}, {pipeline_mode = #tpu.pipeline_mode<synchronous>, transform_indices = @transform_1, window_bounds = array<i64: 20, 128>}, {pipeline_mode = #tpu.pipeline_mode<synchronous>, transform_indices = @transform_2, window_bounds = array<i64: 2, 128>}]} {
    %c0_i32 = arith.constant 0 : i32
    %0 = arith.cmpi eq, %arg0, %c0_i32 : i32
    %1 = arith.extui %0 : i1 to i32
    %c0_i32_0 = arith.constant 0 : i32
    %2 = arith.cmpi ne, %1, %c0_i32_0 : i32
    scf.if %2 {
      %cst_11 = arith.constant 0.000000e+00 : f32
      %16 = vector.broadcast %cst_11 : f32 to vector<2x128xf32>
      %c0_12 = arith.constant 0 : index
      %c0_13 = arith.constant 0 : index
      %17 = vector.load %arg3[%c0_12, %c0_13] : memref<2x128xf32, #tpu.memory_space<vmem>>, vector<2x128xf32>
      tpu.vector_store %arg3[%c0_12, %c0_13], %16 {strides = array<i32>} : memref<2x128xf32, #tpu.memory_space<vmem>>, vector<2x128xf32>,
    } else {
    }
    %c0 = arith.constant 0 : index
    %c0_1 = arith.constant 0 : index
    %c0_2 = arith.constant 0 : index
    %3 = vector.load %arg1[%c0, %c0_1, %c0_2] : memref<2x16x20xf32, #tpu.memory_space<vmem>>, vector<2x16x20xf32>
    %c0_3 = arith.constant 0 : index
    %c0_4 = arith.constant 0 : index
    %4 = vector.load %arg2[%c0_3, %c0_4] : memref<20x128xf32, #tpu.memory_space<vmem>>, vector<20x128xf32>
    %cst = arith.constant dense<0.000000e+00> : vector<2x16x128xf32>
    %5 = tpu.matmul %3, %4, %cst {dimension_numbers = #tpu.dot_dimension_numbers<[2], [0], [0, 1], [1], [0, 0, 0, 1, 1, 1], [], []>} : vector<2x16x20xf32>, vector<20x128xf32>, vector<2x16x128xf32> -> vector<2x16x128xf32>
    %6 = vector.shape_cast %5 : vector<2x16x128xf32> to vector<32x128xf32>
    %cst_5 = arith.constant dense<0.000000e+00> : vector<128xf32>
    %7 = vector.multi_reduction <add>, %6, %cst_5 [0] : vector<32x128xf32> to vector<128xf32>
    %8 = vector.shape_cast %7 : vector<128xf32> to vector<1x128xf32>
    %9 = arith.mulf %6, %6 : vector<32x128xf32>
    %cst_6 = arith.constant dense<0.000000e+00> : vector<128xf32>
    %10 = vector.multi_reduction <add>, %9, %cst_6 [0] : vector<32x128xf32> to vector<128xf32>
    %11 = vector.shape_cast %10 : vector<128xf32> to vector<1x128xf32>
    %c0_7 = arith.constant 0 : index
    %c0_8 = arith.constant 0 : index
    %12 = vector.load %arg3[%c0_7, %c0_8] : memref<2x128xf32, #tpu.memory_space<vmem>>, vector<2x128xf32>
    %13 = tpu.concatenate %8, %11 in 0 : vector<1x128xf32>, vector<1x128xf32> -> vector<2x128xf32>
    %14 = arith.addf %12, %13 : vector<2x128xf32>
    %c0_9 = arith.constant 0 : index
    %c0_10 = arith.constant 0 : index
    %15 = vector.load %arg3[%c0_9, %c0_10] : memref<2x128xf32, #tpu.memory_space<vmem>>, vector<2x128xf32>
    tpu.vector_store %arg3[%c0_9, %c0_10], %14 {strides = array<i32>} : memref<2x128xf32, #tpu.memory_space<vmem>>, vector<2x128xf32>,
    return
  }
  func.func @transform_0(%arg0: i32) -> (i32, i32, i32) {
    %c0_i32 = arith.constant 0 : i32
    %c0_i32_0 = arith.constant 0 : i32
    %c0_i32_1 = arith.constant 0 : i32
    return %arg0, %c0_i32, %c0_i32_0 : i32, i32, i32
  }
  func.func @transform_1(%arg0: i32) -> (i32, i32) {
    %c0_i32 = arith.constant 0 : i32
    %c0_i32_0 = arith.constant 0 : i32
    %c0_i32_1 = arith.constant 0 : i32
    return %c0_i32, %c0_i32_0 : i32, i32
  }
  func.func @transform_2(%arg0: i32) -> (i32, i32) {
    %c0_i32 = arith.constant 0 : i32
    %c0_i32_0 = arith.constant 0 : i32
    %c0_i32_1 = arith.constant 0 : i32
    return %c0_i32, %c0_i32_0 : i32, i32
  }
}

</mosaic_0001>

<llo_original>
// kernel: tpu_custom_call.1
$region0: #{tpu_custom_call.1}
  #allocation0 [shape = 'u32[]', space=smem, size = 0x4, offset = 0x4, fixed_abs, tag = 'smem constant byte address 0x4 - core index']
  #allocation1 [shape = 'u32[144,128]{1,0:T(1,128)}', space=vmem, size = 0x12000, scoped, tag = 'internal scratch']
  %s0 = inlined_call_operand.hbm [shape: f32[2,16,20], index: 0, kind: input, shape index: {}]
  %s1 = inlined_call_operand.hbm [shape: f32[20,128], index: 1, kind: input, shape index: {}]
  %s2 = inlined_call_operand.hbm [shape: f32[2,128], index: 2, kind: output, shape index: {}]
  %s3 = sld [smem:[#allocation0]]
  $region30: #{tpu_custom_call.1} parent=0
    _
  %s5 = ssub.s32 1, %s3
  %s6 = scalar_select 0, %s5, %s3
  $region1: #{tpu_custom_call.1} parent=0
    #allocation2 [shape = 'u8[16384]{0}', space=vmem, size = 0x4000, scoped, tag = 'input window, operand 0, single buffered']
    #allocation3 [shape = 's32[1]{0}', space=sflag, size = 0x4, scoped, tag = 'scoped memory for tpu_custom_call.1']
    #allocation4 [shape = 's32[1]{0}', space=sflag, size = 0x4, scoped, tag = 'scoped memory for tpu_custom_call.1']
    #allocation5 [shape = 'u8[12288]{0}', space=vmem, size = 0x3000, scoped, tag = 'input window, operand 1, single buffered']
    #allocation6 [shape = 's32[1]{0}', space=sflag, size = 0x4, scoped, tag = 'scoped memory for tpu_custom_call.1']
    #allocation7 [shape = 'u8[1024]{0}', space=vmem, size = 0x400, scoped, tag = 'output window, operand 0, single buffered']
    %7 = vsyncpa [#allocation3], 0
    %8 = vsyncpa [#allocation6], 0
    %9 = vsyncpa [#allocation4], 0
    // Predicated region
    $region2: #{tpu_custom_call.1} parent=1 // pred_check
      _
    $region3: #{tpu_custom_call.1} parent=1 // pred_check_branch
      %11 = sbr.rel (0) target = $region5
    $region4: #{tpu_custom_call.1} parent=1 // pred_region
      %s13 = ssub.s32 512, 512
      %14 = vsyncadd [#allocation3], %s13
      %s15 = sshll.u32 [#allocation2], 4
      %s16 = int_to_ptr.vmem [resolvable:$true] %s15
      %21 = dma.hbm_to_vmem [thread:$0]  %s0, 512, %s16, [#allocation3], 128, 128, 8
    $region5: #{tpu_custom_call.1} parent=1 // pred_fallthru
      _
    // Predicated region
    $region6: #{tpu_custom_call.1} parent=1 // pred_check
      _
    $region7: #{tpu_custom_call.1} parent=1 // pred_check_branch
      %23 = sbr.rel (0) target = $region9
    $region8: #{tpu_custom_call.1} parent=1 // pred_region
      %s25 = ssub.s32 384, 384
      %26 = vsyncadd [#allocation6], %s25
      %s27 = sshll.u32 [#allocation5], 4
      %s28 = int_to_ptr.vmem [resolvable:$true] %s27
      %33 = dma.hbm_to_vmem [thread:$0]  %s1, 384, %s28, [#allocation6], 128, 128, 8
    $region9: #{tpu_custom_call.1} parent=1 // pred_fallthru
      _
    // Predicated region
    $region10: #{tpu_custom_call.1} parent=1 // pred_check
      _
    $region11: #{tpu_custom_call.1} parent=1 // pred_check_branch
      %35 = sbr.rel (0) target = $region13
    $region12: #{tpu_custom_call.1} parent=1 // pred_region
      %36 = dma.done [#allocation3], 512
    $region13: #{tpu_custom_call.1} parent=1 // pred_fallthru
      _
    // Predicated region
    $region14: #{tpu_custom_call.1} parent=1 // pred_check
      _
    $region15: #{tpu_custom_call.1} parent=1 // pred_check_branch
      %38 = sbr.rel (0) target = $region17
    $region16: #{tpu_custom_call.1} parent=1 // pred_region
      %39 = dma.done [#allocation6], 384
    $region17: #{tpu_custom_call.1} parent=1 // pred_fallthru
      _
    %p40 = scmp.eq.s32.totalorder 0, 0
    // Predicated region
    $region18: #{tpu_custom_call.1} parent=1 // pred_check
      %p41 = pneg %p40
    $region19: #{tpu_custom_call.1} parent=1 // pred_check_branch
      %43 = sbr.rel (%p41) target = $region21
    $region20: #{tpu_custom_call.1} parent=1 // pred_region
      %44 = vst [vmem:[#allocation7] sm:$0x3] 0.0
    $region21: #{tpu_custom_call.1} parent=1 // pred_fallthru
      _
    %v45 = vld [vmem:[#allocation2] sm:$0xff]
    %v46 = vld [vmem:[#allocation2 + $0x8] sm:$0xff]
    %v47 = vld [vmem:[#allocation2 + $0x10] sm:$0xff]
    %v48 = vld [vmem:[#allocation2 + $0x18] sm:$0xff]
    %v49 = vld [vmem:[#allocation5] sm:$0xff]
    %v50 = vld [vmem:[#allocation5 + $0x8] sm:$0xff]
    %v51 = vld [vmem:[#allocation5 + $0x10] sm:$0xf]
    %vm52 = vcmask 162816
    %v54 = vsel %vm52, %v45, 0
    %v57 = vsel %vm52, %v46, 0
    %v60 = vsel %vm52, %v47, 0
    %v63 = vsel %vm52, %v48, 0
    %vm65 = vcmask 1043456
    %v67 = vsel %vm65, %v51, 0
    %69 = vmatprep.subr.mxu0 0.0
    %70 = vmatpush1.msra.mxu0 %v49
    %71 = vmatprep.subr.mxu0 0.0
    %72 = vmatpush1.msra.mxu0 %v50
    %73 = vmatprep.subr.mxu0 0.0
    %74 = vmatpush1.msra.mxu0 %v67
    %75 = vmatprep.subr.mxu0 0.0
    %76 = vmatpush1.msra.mxu0 0.0
    %77 = vmatprep.subr.mxu0 0.0
    %78 = vmatpush1.msra.mxu0 0.0
    %79 = vmatprep.subr.mxu0 0.0
    %80 = vmatpush1.msra.mxu0 0.0
    %81 = vmatprep.subr.mxu0 0.0
    %82 = vmatpush1.msra.mxu0 0.0
    %83 = vmatprep.subr.mxu0 0.0
    %84 = vmatpush1.msra.mxu0 0.0
    %85 = vmatprep.subr.mxu0 0.0
    %86 = vmatpush1.msra.mxu0 0.0
    %87 = vmatprep.subr.mxu0 0.0
    %88 = vmatpush1.msra.mxu0 0.0
    %89 = vmatprep.subr.mxu0 0.0
    %90 = vmatpush1.msra.mxu0 0.0
    %91 = vmatprep.subr.mxu0 0.0
    %92 = vmatpush1.msra.mxu0 0.0
    %93 = vmatprep.subr.mxu0 0.0
    %94 = vmatpush1.msra.mxu0 0.0
    %95 = vmatprep.subr.mxu0 0.0
    %96 = vmatpush1.msra.mxu0 0.0
    %97 = vmatprep.subr.mxu0 0.0
    %98 = vmatpush1.msra.mxu0 0.0
    %99 = vmatprep.subr.mxu0 0.0
    %100 = vmatpush1.msra.mxu0 0.0
    %101 = vmatprep.subr.mxu0 0.0
    %102 = vmatpush1.msra.mxu0 0.0
    %103 = vmatprep.subr.mxu0 0.0
    %104 = vmatpush1.msra.mxu0 0.0
    %105 = vmatprep.subr.mxu0 0.0
    %106 = vmatpush1.msra.mxu0 0.0
    %107 = vmatprep.subr.mxu0 0.0
    %108 = vmatpush1.msra.mxu0 0.0
    %109 = vmatprep.subr.mxu0 0.0
    %110 = vmatpush1.msra.mxu0 0.0
    %111 = vmatprep.subr.mxu0 0.0
    %112 = vmatpush1.msra.mxu0 0.0
    %113 = vmatprep.subr.mxu0 0.0
    %114 = vmatpush1.msra.mxu0 0.0
    %115 = vmatprep.subr.mxu0 0.0
    %116 = vmatpush1.msra.mxu0 0.0
    %117 = vmatprep.subr.mxu0 0.0
    %118 = vmatpush1.msra.mxu0 0.0
    %119 = vmatprep.subr.mxu0 0.0
    %120 = vmatpush1.msra.mxu0 0.0
    %121 = vmatprep.subr.mxu0 0.0
    %122 = vmatpush1.msra.mxu0 0.0
    %123 = vmatprep.subr.mxu0 0.0
    %124 = vmatpush1.msra.mxu0 0.0
    %125 = vmatprep.subr.mxu0 0.0
    %126 = vmatpush1.msra.mxu0 0.0
    %127 = vmatprep.subr.mxu0 0.0
    %128 = vmatpush1.msra.mxu0 0.0
    %129 = vmatprep.subr.mxu0 0.0
    %130 = vmatpush1.msra.mxu0 0.0
    %131 = vmatprep.subr.mxu0 0.0
    %132 = vmatpush1.msra.mxu0 0.0
    %133 = vmatprep.mubr.f32.mxu0 0.0
    %134 = vmatmul.mubr.f32.gmra.mrb[0].mxu0 %v54
    %v135 = vpop.f32.mrb[0].mxu0
    %v136 = vadd.f32 0.0, %v135
    %v137 = vpop.f32.mrb[0].mxu0
    %138 = vmatprep.mubr.f32.mxu0 0.0
    %139 = vmatmul.mubr.f32.gmra.mrb[0].mxu0 %v57
    %v140 = vpop.f32.mrb[0].mxu0
    %v141 = vadd.f32 0.0, %v140
    %v142 = vpop.f32.mrb[0].mxu0
    %143 = vmatprep.mubr.f32.mxu0 0.0
    %144 = vmatmul.mubr.f32.gmra.mrb[0].mxu0 %v60
    %v145 = vpop.f32.mrb[0].mxu0
    %v146 = vadd.f32 0.0, %v145
    %v147 = vpop.f32.mrb[0].mxu0
    %148 = vmatprep.mubr.f32.mxu0 0.0
    %149 = vmatmul.mubr.f32.gmra.mrb[0].mxu0 %v63
    %v150 = vpop.f32.mrb[0].mxu0
    %v151 = vadd.f32 0.0, %v150
    %v152 = vpop.f32.mrb[0].mxu0
    %153 = vdwg.mxu0
    %v154 = vadd.f32 %v136, %v141
    %v155 = vadd.f32 %v154, %v146
    %v156 = vadd.f32 %v155, %v151
    %v157 = vrot.slane %v156, 4
    %v158 = vadd.f32 %v156, %v157
    %v159 = vrot.slane %v158, 2
    %v160 = vadd.f32 %v158, %v159
    %v161 = vrot.slane %v160, 1
    %v162 = vadd.f32 %v160, %v161
    %v163 = vmul.f32 %v136, %v136
    %v164 = vmul.f32 %v141, %v141
    %v165 = vmul.f32 %v146, %v146
    %v166 = vmul.f32 %v151, %v151
    %v167 = vadd.f32 %v163, %v164
    %v168 = vadd.f32 %v167, %v165
    %v169 = vadd.f32 %v168, %v166
    %v170 = vrot.slane %v169, 4
    %v171 = vadd.f32 %v169, %v170
    %v172 = vrot.slane %v171, 2
    %v173 = vadd.f32 %v171, %v172
    %v174 = vrot.slane %v173, 1
    %v175 = vadd.f32 %v173, %v174
    %v176 = vld [vmem:[#allocation7] sm:$0x3]
    %vm177 = vcmask 1040384
    %v178 = vsel %vm177, %v162, %v175
    %v179 = vadd.f32 %v176, %v178
    %180 = vst [vmem:[#allocation7] sm:$0x3] %v179
    // Predicated region
    $region22: #{tpu_custom_call.1} parent=1 // pred_check
      _
    $region23: #{tpu_custom_call.1} parent=1 // pred_check_branch
      %182 = sbr.rel (0) target = $region25
    $region24: #{tpu_custom_call.1} parent=1 // pred_region
      %s184 = ssub.s32 32, 32
      %185 = vsyncadd [#allocation4], %s184
      %s187 = sshll.u32 [#allocation7], 4
      %s188 = int_to_ptr.vmem [resolvable:$true] %s187
      %190 = dma.vmem_to_hbm [thread:$0]  %s188, 32, %s2, [#allocation4]
    $region25: #{tpu_custom_call.1} parent=1 // pred_fallthru
      _
    // Predicated region
    $region26: #{tpu_custom_call.1} parent=1 // pred_check
      _
    $region27: #{tpu_custom_call.1} parent=1 // pred_check_branch
      %192 = sbr.rel (0) target = $region29
    $region28: #{tpu_custom_call.1} parent=1 // pred_region
      %193 = dma.done [#allocation4], 32
    $region29: #{tpu_custom_call.1} parent=1 // pred_fallthru
      _
    %194 = vsyncpa [#allocation3], 1
    %195 = vsyncpa [#allocation6], 1
    %196 = vsyncpa [#allocation4], 1

</llo_original>
